<compile_context>
chip_gen: v6e
topology: v6e:2x2x1
jax: 0.10.0
libtpu: 0.0.40
codegen_flags: <defaults>
</compile_context>

<pallas_src>
import functools

import jax
import jax.numpy as jnp
from jax.experimental import pallas as pl
from jax.experimental.pallas import tpu as pltpu


def _depth_l2_kernel(pred_ref, gt_ref, out_ref, *, eps, rows, block_rows,
                     need_row_mask):
    g = gt_ref[...]                                    # (block_rows, 128) f32
    d = pred_ref[...] - g
    keep = g > eps                                     # depth validity mask
    if need_row_mask:
        # Final grid block reads past the real array; mask those rows out.
        row = jax.lax.broadcasted_iota(jnp.int32, g.shape, 0)
        global_row = pl.program_id(0) * block_rows + row
        keep = jnp.logical_and(keep, global_row < rows)
    sq = jnp.where(keep, d * d, 0.0)                   # masked squared error

    # Reduce sublane-groups of 8 rows into one (8, 128) partial tile.
    # Splitting the second-minor dim on the native 8-row tile boundary is
    # layout-preserving; the reduction is plain vector adds across vregs
    # (VPU only, no XLU cross-lane work) and is hidden under the input DMAs.
    r, lanes = sq.shape
    out_ref[...] = jnp.sum(sq.reshape(r // 8, 8, lanes), axis=0)


def depth_l2_loss(pred, gt, eps=1e-5, block_rows_target=1024):
    """Pallas implementation of DepthL2Loss.forward -> (masked SSE, numel)."""
    numel = pred.size

    p = pred.reshape(-1).astype(jnp.float32)
    g = gt.reshape(-1).astype(jnp.float32)

    # Lane-dense layout: rows of 128 lanes; pad only the sub-128 tail.
    rows = (numel + 127) // 128
    pad = rows * 128 - numel
    if pad:
        p = jnp.pad(p, (0, pad))                       # gt padding = 0 -> mask False
        g = jnp.pad(g, (0, pad))
    p2 = p.reshape(rows, 128)
    g2 = g.reshape(rows, 128)

    rows8 = ((rows + 7) // 8) * 8                      # block_rows must be 8-aligned
    block_rows = min(block_rows_target, rows8)
    num_blocks = (rows + block_rows - 1) // block_rows
    need_row_mask = (rows % block_rows) != 0           # ragged final block?

    partials = pl.pallas_call(
        functools.partial(
            _depth_l2_kernel,
            eps=float(eps),
            rows=rows,
            block_rows=block_rows,
            need_row_mask=need_row_mask,
        ),
        out_shape=jax.ShapeDtypeStruct((num_blocks * 8, 128), jnp.float32),
        grid_spec=pltpu.PrefetchScalarGridSpec(
            num_scalar_prefetch=0,
            grid=(num_blocks,),
            in_specs=[
                pl.BlockSpec((block_rows, 128), lambda i: (i, 0)),
                pl.BlockSpec((block_rows, 128), lambda i: (i, 0)),
            ],
            out_specs=pl.BlockSpec((8, 128), lambda i: (i, 0)),
        ),
        compiler_params=pltpu.CompilerParams(
            dimension_semantics=("parallel",),         # independent per-block partials
        ),
    )(p2, g2)

    loss = jnp.sum(partials)                           # tiny final reduce in XLA
    return loss, numel


def _reference(pred, gt, eps=1e-5):
    mask = gt > eps
    img1 = jnp.where(mask, pred, 0.0)
    img2 = jnp.where(mask, gt, 0.0)
    return jnp.sum((img1 - img2) ** 2), pred.size


if __name__ == "__main__":
    bs, c, h, w = 2, 4, 16, 16
    key = jax.random.PRNGKey(0)
    k1, k2, k3 = jax.random.split(key, 3)

    # gt: depth-like map with some exact zeros so the (gt > eps) mask matters.
    gt_vals = jax.random.uniform(k1, (bs, c, h, w), minval=0.0, maxval=2.0,
                                 dtype=jnp.float32)
    gt_keep = jax.random.uniform(k2, (bs, c, h, w)) > 0.3
    gt = jnp.where(gt_keep, gt_vals, 0.0)
    pred = jax.random.uniform(k3, (bs, c, h, w), minval=0.0, maxval=2.0,
                              dtype=jnp.float32)

    loss, numel = depth_l2_loss(pred, gt)
    loss = jax.block_until_ready(loss)

    ref_loss, ref_numel = _reference(pred, gt)
    ref_loss = jax.block_until_ready(ref_loss)

    assert numel == ref_numel, (numel, ref_numel)
    assert jnp.allclose(loss, ref_loss, rtol=1e-5, atol=1e-5), (loss, ref_loss)
    print("KERNEL_OK")
</pallas_src>

<mosaic_0001>
module attributes {stable_mosaic.version = 11 : i64} {
  func.func @_depth_l2_kernel(%arg0: i32, %arg1: memref<16x128xf32, #tpu.memory_space<vmem>>, %arg2: memref<16x128xf32, #tpu.memory_space<vmem>>, %arg3: memref<8x128xf32, #tpu.memory_space<vmem>>) attributes {dimension_semantics = [#tpu.dimension_semantics<parallel>], iteration_bounds = array<i64: 1>, scalar_prefetch = 0 : i64, scratch_operands = 0 : i64, tpu.core_type = #tpu.core_type<tc>, window_params = [{transform_indices = @transform_0, window_bounds = array<i64: 16, 128>}, {transform_indices = @transform_1, window_bounds = array<i64: 16, 128>}, {transform_indices = @transform_2, window_bounds = array<i64: 8, 128>}]} {
    %c0 = arith.constant 0 : index
    %c0_0 = arith.constant 0 : index
    %0 = vector.load %arg2[%c0, %c0_0] : memref<16x128xf32, #tpu.memory_space<vmem>>, vector<16x128xf32>
    %c0_1 = arith.constant 0 : index
    %c0_2 = arith.constant 0 : index
    %1 = vector.load %arg1[%c0_1, %c0_2] : memref<16x128xf32, #tpu.memory_space<vmem>>, vector<16x128xf32>
    %2 = arith.subf %1, %0 : vector<16x128xf32>
    %cst = arith.constant 9.99999974E-6 : f32
    %3 = vector.broadcast %cst : f32 to vector<16x128xf32>
    %4 = arith.cmpf ogt, %0, %3 : vector<16x128xf32>
    %5 = arith.mulf %2, %2 : vector<16x128xf32>
    %cst_3 = arith.constant 0.000000e+00 : f32
    %6 = vector.broadcast %cst_3 : f32 to vector<16x128xf32>
    %7 = arith.select %4, %5, %6 : vector<16x128xi1>, vector<16x128xf32>
    %8 = vector.shape_cast %7 : vector<16x128xf32> to vector<2x8x128xf32>
    %cst_4 = arith.constant dense<0.000000e+00> : vector<8x128xf32>
    %9 = vector.multi_reduction <add>, %8, %cst_4 [0] : vector<2x8x128xf32> to vector<8x128xf32>
    %c0_5 = arith.constant 0 : index
    %c0_6 = arith.constant 0 : index
    %10 = vector.load %arg3[%c0_5, %c0_6] : memref<8x128xf32, #tpu.memory_space<vmem>>, vector<8x128xf32>
    tpu.vector_store %arg3[%c0_5, %c0_6], %9 {strides = array<i32>} : memref<8x128xf32, #tpu.memory_space<vmem>>, vector<8x128xf32>,
    return
  }
  func.func @transform_0(%arg0: i32) -> (i32, i32) {
    %c0_i32 = arith.constant 0 : i32
    %c0_i32_0 = arith.constant 0 : i32
    return %arg0, %c0_i32 : i32, i32
  }
  func.func @transform_1(%arg0: i32) -> (i32, i32) {
    %c0_i32 = arith.constant 0 : i32
    %c0_i32_0 = arith.constant 0 : i32
    return %arg0, %c0_i32 : i32, i32
  }
  func.func @transform_2(%arg0: i32) -> (i32, i32) {
    %c0_i32 = arith.constant 0 : i32
    %c0_i32_0 = arith.constant 0 : i32
    return %arg0, %c0_i32 : i32, i32
  }
}

</mosaic_0001>

<llo_original>
// kernel: tpu_custom_call.1
$region0: #{tpu_custom_call.1}
  #allocation0 [shape = 'u32[]', space=smem, size = 0x4, offset = 0x4, fixed_abs, tag = 'smem constant byte address 0x4 - core index']
  #allocation1 [shape = 'u32[144,128]{1,0:T(1,128)}', space=vmem, size = 0x12000, scoped, tag = 'internal scratch']
  %s0 = inlined_call_operand.hbm [shape: f32[16,128], index: 0, kind: input, shape index: {}]
  %s1 = inlined_call_operand.hbm [shape: f32[16,128], index: 1, kind: input, shape index: {}]
  %s2 = inlined_call_operand.hbm [shape: f32[8,128], index: 2, kind: output, shape index: {}]
  %s3 = sld [smem:[#allocation0]]
  $region26: #{tpu_custom_call.1} parent=0
    _
  %s5 = ssub.s32 1, %s3
  %s6 = scalar_select 0, %s5, %s3
  $region1: #{tpu_custom_call.1} parent=0
    #allocation2 [shape = 'u8[8192]{0}', space=vmem, size = 0x2000, scoped, tag = 'input window, operand 0, single buffered']
    #allocation3 [shape = 's32[1]{0}', space=sflag, size = 0x4, scoped, tag = 'scoped memory for tpu_custom_call.1']
    #allocation4 [shape = 's32[1]{0}', space=sflag, size = 0x4, scoped, tag = 'scoped memory for tpu_custom_call.1']
    #allocation5 [shape = 'u8[8192]{0}', space=vmem, size = 0x2000, scoped, tag = 'input window, operand 1, single buffered']
    #allocation6 [shape = 's32[1]{0}', space=sflag, size = 0x4, scoped, tag = 'scoped memory for tpu_custom_call.1']
    #allocation7 [shape = 'u8[4096]{0}', space=vmem, size = 0x1000, scoped, tag = 'output window, operand 0, single buffered']
    %7 = vsyncpa [#allocation3], 0
    %8 = vsyncpa [#allocation6], 0
    %9 = vsyncpa [#allocation4], 0
    // Predicated region
    $region2: #{tpu_custom_call.1} parent=1 // pred_check
      _
    $region3: #{tpu_custom_call.1} parent=1 // pred_check_branch
      %11 = sbr.rel (0) target = $region5
    $region4: #{tpu_custom_call.1} parent=1 // pred_region
      %s13 = ssub.s32 256, 256
      %14 = vsyncadd [#allocation3], %s13
      %s15 = sshll.u32 [#allocation2], 4
      %s16 = int_to_ptr.vmem [resolvable:$true] %s15
      %21 = dma.hbm_to_vmem [thread:$0]  %s0, 256, %s16, [#allocation3], 128, 128, 8
    $region5: #{tpu_custom_call.1} parent=1 // pred_fallthru
      _
    // Predicated region
    $region6: #{tpu_custom_call.1} parent=1 // pred_check
      _
    $region7: #{tpu_custom_call.1} parent=1 // pred_check_branch
      %23 = sbr.rel (0) target = $region9
    $region8: #{tpu_custom_call.1} parent=1 // pred_region
      %s25 = ssub.s32 256, 256
      %26 = vsyncadd [#allocation6], %s25
      %s27 = sshll.u32 [#allocation5], 4
      %s28 = int_to_ptr.vmem [resolvable:$true] %s27
      %33 = dma.hbm_to_vmem [thread:$0]  %s1, 256, %s28, [#allocation6], 128, 128, 8
    $region9: #{tpu_custom_call.1} parent=1 // pred_fallthru
      _
    // Predicated region
    $region10: #{tpu_custom_call.1} parent=1 // pred_check
      _
    $region11: #{tpu_custom_call.1} parent=1 // pred_check_branch
      %35 = sbr.rel (0) target = $region13
    $region12: #{tpu_custom_call.1} parent=1 // pred_region
      %36 = dma.done [#allocation3], 256
    $region13: #{tpu_custom_call.1} parent=1 // pred_fallthru
      _
    // Predicated region
    $region14: #{tpu_custom_call.1} parent=1 // pred_check
      _
    $region15: #{tpu_custom_call.1} parent=1 // pred_check_branch
      %38 = sbr.rel (0) target = $region17
    $region16: #{tpu_custom_call.1} parent=1 // pred_region
      %39 = dma.done [#allocation6], 256
    $region17: #{tpu_custom_call.1} parent=1 // pred_fallthru
      _
    %v40 = vld [vmem:[#allocation5] sm:$0xff]
    %v41 = vld [vmem:[#allocation5 + $0x8] sm:$0xff]
    %v42 = vld [vmem:[#allocation2] sm:$0xff]
    %v43 = vld [vmem:[#allocation2 + $0x8] sm:$0xff]
    %v44 = vsub.f32 %v42, %v40
    %v45 = vsub.f32 %v43, %v41
    %vm46 = vcmp.gt.f32.partialorder %v40, 1e-05
    %vm47 = vcmp.gt.f32.partialorder %v41, 1e-05
    %v48 = vmul.f32 %v44, %v44
    %v49 = vmul.f32 %v45, %v45
    %v50 = vsel %vm46, %v48, 0.0
    %v51 = vsel %vm47, %v49, 0.0
    %v52 = vadd.f32 %v50, %v51
    %53 = vst [vmem:[#allocation7] sm:$0xff] %v52
    // Predicated region
    $region18: #{tpu_custom_call.1} parent=1 // pred_check
      _
    $region19: #{tpu_custom_call.1} parent=1 // pred_check_branch
      %55 = sbr.rel (0) target = $region21
    $region20: #{tpu_custom_call.1} parent=1 // pred_region
      %s57 = ssub.s32 128, 128
      %58 = vsyncadd [#allocation4], %s57
      %s60 = sshll.u32 [#allocation7], 4
      %s61 = int_to_ptr.vmem [resolvable:$true] %s60
      %63 = dma.vmem_to_hbm [thread:$0]  %s61, 128, %s2, [#allocation4]
    $region21: #{tpu_custom_call.1} parent=1 // pred_fallthru
      _
    // Predicated region
    $region22: #{tpu_custom_call.1} parent=1 // pred_check
      _
    $region23: #{tpu_custom_call.1} parent=1 // pred_check_branch
      %65 = sbr.rel (0) target = $region25
    $region24: #{tpu_custom_call.1} parent=1 // pred_region
      %66 = dma.done [#allocation4], 128
    $region25: #{tpu_custom_call.1} parent=1 // pred_fallthru
      _
    %67 = vsyncpa [#allocation3], 1
    %68 = vsyncpa [#allocation6], 1
    %69 = vsyncpa [#allocation4], 1

</llo_original>
